<compile_context>
chip_gen: v7x
topology: tpu7x:2x2x1
jax: 0.10.0
libtpu: 0.0.40
codegen_flags: <defaults>
</compile_context>

<pallas_src>
import functools

import jax
import jax.numpy as jnp
from jax.experimental import pallas as pl
from jax.experimental.pallas import tpu as pltpu


def _round_up(x, m):
    return ((x + m - 1) // m) * m


def _sage_stack_kernel(a_ref, invd_ref, x0_ref, w_ref, b_ref, o_ref, *, f_pad):
    """All SAGEConv layers fused; grid axis = layer (sequential carry in o_ref).

    Per layer (reassociated + fused projections, bf16 MXU / f32 accumulate):
        P   = X @ [Wl | Wr]                        # [N, 2*f_pad], one MXU pass
        agg = (A_counts @ P[:, :f_pad]) * inv_deg  # exact mean aggregation
        X'  = relu(agg + P[:, f_pad:] + b)
    """
    layer = pl.program_id(0)

    # Layer 0: seed the resident output buffer (the layer carry) with X0.
    @pl.when(layer == 0)
    def _():
        o_ref[...] = x0_ref[...]

    x = o_ref[...]                                 # [N, f_pad] f32 carry
    a = a_ref[...]                                 # [N, N]     bf16 integer counts
    inv_d = invd_ref[...]                          # [N, 1]     f32 (1/in-degree)
    w = w_ref[0]                                   # [f_pad, 2*f_pad] bf16
    b = b_ref[0]                                   # [1, f_pad] f32

    # Fused projection: lin_l and lin_r in a single MXU pass.
    p = jnp.dot(x.astype(jnp.bfloat16), w, preferred_element_type=jnp.float32)
    p_l = p[:, :f_pad]                             # term to be mean-aggregated
    p_r = p[:, f_pad:]                             # self / root term

    # Mean aggregation applied AFTER the projection:  (A @ X) @ Wl == A @ (X @ Wl).
    # Counts matmul on the MXU, f32 1/deg normalization on the VPU.
    agg = jnp.dot(a, p_l.astype(jnp.bfloat16), preferred_element_type=jnp.float32)

    h = agg * inv_d + p_r + b
    o_ref[...] = jnp.maximum(h, 0.0)               # ReLU
    # TODO(synk): F.dropout is identity in inference mode; training-mode dropout not applied.


def sage_forward(adj_counts_bf16, inv_deg, x_pad, w_all, b_all):
    """One pallas_call for the whole multi-layer forward pass."""
    n, f_pad = x_pad.shape
    num_layers = w_all.shape[0]

    flops = num_layers * (2 * n * f_pad * (2 * f_pad)      # fused projection
                          + 2 * n * n * f_pad)             # mean aggregation
    bytes_accessed = (adj_counts_bf16.size * 2 + inv_deg.size * 4
                      + x_pad.size * 4 + w_all.size * 2
                      + b_all.size * 4 + n * f_pad * 4)

    kernel = functools.partial(_sage_stack_kernel, f_pad=f_pad)
    return pl.pallas_call(
        kernel,
        out_shape=jax.ShapeDtypeStruct((n, f_pad), jnp.float32),
        grid=(num_layers,),
        in_specs=[
            pl.BlockSpec((n, n), lambda l: (0, 0)),                    # A counts: resident across layers
            pl.BlockSpec((n, 1), lambda l: (0, 0)),                    # 1/deg:    resident
            pl.BlockSpec((n, f_pad), lambda l: (0, 0)),                # X0:       resident
            pl.BlockSpec((1, f_pad, 2 * f_pad), lambda l: (l, 0, 0)),  # per-layer packed [Wl|Wr]
            pl.BlockSpec((1, 1, f_pad), lambda l: (l, 0, 0)),          # per-layer bias
        ],
        out_specs=pl.BlockSpec((n, f_pad), lambda l: (0, 0)),          # layer carry, VMEM-resident
        compiler_params=pltpu.CompilerParams(
            dimension_semantics=("arbitrary",)),                       # sequential layer dependency
        cost_estimate=pl.CostEstimate(
            flops=flops, transcendentals=0, bytes_accessed=bytes_accessed),
    )(adj_counts_bf16, inv_deg, x_pad, w_all, b_all)


def build_adjacency(edge_index, num_nodes):
    """Dense adjacency (integer edge counts) + 1/in-degree, realizing PyG scatter-mean.

    edge_index: int32 [2, E]; edge_index[0] = source j, edge_index[1] = target i.
    Nodes with no incoming edges get an all-zero row (mean of empty set -> 0).
    Returns (counts [N, N] f32, inv_deg [N, 1] f32).
    """
    src = edge_index[0]
    dst = edge_index[1]
    counts = jnp.zeros((num_nodes, num_nodes), jnp.float32)
    counts = counts.at[dst, src].add(1.0)
    indeg = counts.sum(axis=1, keepdims=True)
    inv_deg = 1.0 / jnp.maximum(indeg, 1.0)
    return counts, inv_deg


class GraphSAGEPallas:
    """JAX/Pallas port of the PyTorch GraphSAGE module (inference mode)."""

    def __init__(self, in_channels, hidden_channels, num_layers, dropout, key):
        self.num_layers = num_layers
        self.hidden_channels = hidden_channels
        self.dropout = dropout  # inference forward -> dropout is identity
        # Lane-dense padded feature width (>=128, multiple of 128).
        self.f_pad = _round_up(max(in_channels, hidden_channels, 128), 128)
        f_pad = self.f_pad

        dims = [in_channels] + [hidden_channels] * num_layers
        w_all, b_all = [], []
        for l in range(num_layers):
            key, k1, k2, k3 = jax.random.split(key, 4)
            f_in, f_out = dims[l], dims[l + 1]
            # Deterministic synthetic init (Linear-like scale).
            scale = 1.0 / jnp.sqrt(jnp.float32(f_in))
            w_l = jax.random.uniform(k1, (f_out, f_in), jnp.float32, -scale, scale)
            w_r = jax.random.uniform(k2, (f_out, f_in), jnp.float32, -scale, scale)
            b_l = jax.random.uniform(k3, (f_out,), jnp.float32, -scale, scale)
            # Pack [Wl | Wr] (pre-transposed to X @ W form), zero-padded to f_pad.
            # Padded feature columns stay identically zero through every layer
            # (zero weight columns + zero bias + ReLU), so padding is exact.
            w_pack = jnp.zeros((f_pad, 2 * f_pad), jnp.float32)
            w_pack = w_pack.at[:f_in, :f_out].set(w_l.T)
            w_pack = w_pack.at[:f_in, f_pad:f_pad + f_out].set(w_r.T)
            b_pack = jnp.zeros((1, f_pad), jnp.float32).at[0, :f_out].set(b_l)
            w_all.append(w_pack)
            b_all.append(b_pack)

        self.w_all = jnp.stack(w_all).astype(jnp.bfloat16)   # [L, f_pad, 2*f_pad]
        self.b_all = jnp.stack(b_all)                        # [L, 1, f_pad] f32

    def __call__(self, x, edge_index):
        n, f_in = x.shape
        counts, inv_deg = build_adjacency(edge_index, n)
        adj_counts = counts.astype(jnp.bfloat16)   # small integers -> exact in bf16
        x_pad = jnp.zeros((n, self.f_pad), jnp.float32).at[:, :f_in].set(x)
        out = sage_forward(adj_counts, inv_deg, x_pad, self.w_all, self.b_all)
        return out[:, :self.hidden_channels]


if __name__ == "__main__":
    key = jax.random.PRNGKey(0)
    k_x, k_e, k_p = jax.random.split(key, 3)

    num_nodes = 128
    in_channels = 32
    hidden_channels = 32
    num_layers = 2
    dropout = 0.5
    num_edges = 512

    x = jax.random.normal(k_x, (num_nodes, in_channels), jnp.float32)
    edge_index = jax.random.randint(k_e, (2, num_edges), 0, num_nodes, jnp.int32)

    model = GraphSAGEPallas(in_channels, hidden_channels, num_layers, dropout, k_p)
    out = model(x, edge_index)
    jax.block_until_ready(out)

    assert out.shape == (num_nodes, hidden_channels)
    assert bool(jnp.all(jnp.isfinite(out)))
    print("KERNEL_OK")
</pallas_src>

<mosaic_0001>
module attributes {stable_mosaic.version = 11 : i64} {
  func.func @_sage_stack_kernel(%arg0: i32, %arg1: memref<128x128xbf16, #tpu.memory_space<vmem>>, %arg2: memref<128x1xf32, #tpu.memory_space<vmem>>, %arg3: memref<128x128xf32, #tpu.memory_space<vmem>>, %arg4: memref<1x128x256xbf16, #tpu.memory_space<vmem>>, %arg5: memref<1x1x128xf32, #tpu.memory_space<vmem>>, %arg6: memref<128x128xf32, #tpu.memory_space<vmem>>) attributes {dimension_semantics = [#tpu.dimension_semantics<arbitrary>], iteration_bounds = array<i64: 2>, scalar_prefetch = 0 : i64, scratch_operands = 0 : i64, tpu.core_type = #tpu.core_type<tc>, window_params = [{pipeline_mode = #tpu.pipeline_mode<synchronous>, transform_indices = @transform_0, window_bounds = array<i64: 128, 128>}, {pipeline_mode = #tpu.pipeline_mode<synchronous>, transform_indices = @transform_1, window_bounds = array<i64: 128, 1>}, {pipeline_mode = #tpu.pipeline_mode<synchronous>, transform_indices = @transform_2, window_bounds = array<i64: 128, 128>}, {transform_indices = @transform_3, window_bounds = array<i64: 1, 128, 256>}, {transform_indices = @transform_4, window_bounds = array<i64: 1, 1, 128>}, {pipeline_mode = #tpu.pipeline_mode<synchronous>, transform_indices = @transform_5, window_bounds = array<i64: 128, 128>}]} {
    %c0_i32 = arith.constant 0 : i32
    %0 = arith.cmpi eq, %arg0, %c0_i32 : i32
    %1 = arith.extui %0 : i1 to i32
    %c0_i32_0 = arith.constant 0 : i32
    %2 = arith.cmpi ne, %1, %c0_i32_0 : i32
    scf.if %2 {
      %c0_16 = arith.constant 0 : index
      %c0_17 = arith.constant 0 : index
      %24 = vector.load %arg3[%c0_16, %c0_17] : memref<128x128xf32, #tpu.memory_space<vmem>>, vector<128x128xf32>
      %c0_18 = arith.constant 0 : index
      %c0_19 = arith.constant 0 : index
      %25 = vector.load %arg6[%c0_18, %c0_19] : memref<128x128xf32, #tpu.memory_space<vmem>>, vector<128x128xf32>
      tpu.vector_store %arg6[%c0_18, %c0_19], %24 {strides = array<i32>} : memref<128x128xf32, #tpu.memory_space<vmem>>, vector<128x128xf32>,
    } else {
    }
    %c0 = arith.constant 0 : index
    %c0_1 = arith.constant 0 : index
    %3 = vector.load %arg6[%c0, %c0_1] : memref<128x128xf32, #tpu.memory_space<vmem>>, vector<128x128xf32>
    %c0_2 = arith.constant 0 : index
    %c0_3 = arith.constant 0 : index
    %4 = vector.load %arg1[%c0_2, %c0_3] : memref<128x128xbf16, #tpu.memory_space<vmem>>, vector<128x128xbf16>
    %c0_4 = arith.constant 0 : index
    %c0_5 = arith.constant 0 : index
    %5 = vector.load %arg2[%c0_4, %c0_5] : memref<128x1xf32, #tpu.memory_space<vmem>>, vector<128x1xf32>
    %c0_6 = arith.constant 0 : index
    %c0_7 = arith.constant 0 : index
    %c0_8 = arith.constant 0 : index
    %6 = vector.load %arg4[%c0_6, %c0_7, %c0_8] : memref<1x128x256xbf16, #tpu.memory_space<vmem>>, vector<1x128x256xbf16>
    %7 = vector.shape_cast %6 : vector<1x128x256xbf16> to vector<128x256xbf16>
    %c0_9 = arith.constant 0 : index
    %c0_10 = arith.constant 0 : index
    %c0_11 = arith.constant 0 : index
    %8 = vector.load %arg5[%c0_9, %c0_10, %c0_11] : memref<1x1x128xf32, #tpu.memory_space<vmem>>, vector<1x1x128xf32>
    %9 = vector.shape_cast %8 : vector<1x1x128xf32> to vector<1x128xf32>
    %10 = arith.truncf %3 : vector<128x128xf32> to vector<128x128xbf16>
    %cst = arith.constant dense<0.000000e+00> : vector<128x256xf32>
    %11 = tpu.matmul %10, %7, %cst {dimension_numbers = #tpu.dot_dimension_numbers<[1], [0], [0], [1], [0, 0, 1, 1], [], []>} : vector<128x128xbf16>, vector<128x256xbf16>, vector<128x256xf32> -> vector<128x256xf32>
    %12 = vector.extract_strided_slice %11 {offsets = [0, 0], sizes = [128, 128], strides = [1, 1]} : vector<128x256xf32> to vector<128x128xf32>
    %13 = vector.extract_strided_slice %11 {offsets = [0, 128], sizes = [128, 128], strides = [1, 1]} : vector<128x256xf32> to vector<128x128xf32>
    %14 = arith.truncf %12 : vector<128x128xf32> to vector<128x128xbf16>
    %cst_12 = arith.constant dense<0.000000e+00> : vector<128x128xf32>
    %15 = tpu.matmul %4, %14, %cst_12 {dimension_numbers = #tpu.dot_dimension_numbers<[1], [0], [0], [1], [0, 0, 1, 1], [], []>} : vector<128x128xbf16>, vector<128x128xbf16>, vector<128x128xf32> -> vector<128x128xf32>
    %16 = vector.broadcast %5 : vector<128x1xf32> to vector<128x128xf32>
    %17 = arith.mulf %15, %16 : vector<128x128xf32>
    %18 = arith.addf %17, %13 : vector<128x128xf32>
    %19 = vector.broadcast %9 : vector<1x128xf32> to vector<128x128xf32>
    %20 = arith.addf %18, %19 : vector<128x128xf32>
    %cst_13 = arith.constant 0.000000e+00 : f32
    %21 = vector.broadcast %cst_13 : f32 to vector<128x128xf32>
    %22 = arith.maximumf %20, %21 : vector<128x128xf32>
    %c0_14 = arith.constant 0 : index
    %c0_15 = arith.constant 0 : index
    %23 = vector.load %arg6[%c0_14, %c0_15] : memref<128x128xf32, #tpu.memory_space<vmem>>, vector<128x128xf32>
    tpu.vector_store %arg6[%c0_14, %c0_15], %22 {strides = array<i32>} : memref<128x128xf32, #tpu.memory_space<vmem>>, vector<128x128xf32>,
    return
  }
  func.func @transform_0(%arg0: i32) -> (i32, i32) {
    %c0_i32 = arith.constant 0 : i32
    %c0_i32_0 = arith.constant 0 : i32
    %c0_i32_1 = arith.constant 0 : i32
    return %c0_i32, %c0_i32_0 : i32, i32
  }
  func.func @transform_1(%arg0: i32) -> (i32, i32) {
    %c0_i32 = arith.constant 0 : i32
    %c0_i32_0 = arith.constant 0 : i32
    %c0_i32_1 = arith.constant 0 : i32
    return %c0_i32, %c0_i32_0 : i32, i32
  }
  func.func @transform_2(%arg0: i32) -> (i32, i32) {
    %c0_i32 = arith.constant 0 : i32
    %c0_i32_0 = arith.constant 0 : i32
    %c0_i32_1 = arith.constant 0 : i32
    return %c0_i32, %c0_i32_0 : i32, i32
  }
  func.func @transform_3(%arg0: i32) -> (i32, i32, i32) {
    %c0_i32 = arith.constant 0 : i32
    %c0_i32_0 = arith.constant 0 : i32
    %c0_i32_1 = arith.constant 0 : i32
    return %arg0, %c0_i32, %c0_i32_0 : i32, i32, i32
  }
  func.func @transform_4(%arg0: i32) -> (i32, i32, i32) {
    %c0_i32 = arith.constant 0 : i32
    %c0_i32_0 = arith.constant 0 : i32
    %c0_i32_1 = arith.constant 0 : i32
    return %arg0, %c0_i32, %c0_i32_0 : i32, i32, i32
  }
  func.func @transform_5(%arg0: i32) -> (i32, i32) {
    %c0_i32 = arith.constant 0 : i32
    %c0_i32_0 = arith.constant 0 : i32
    %c0_i32_1 = arith.constant 0 : i32
    return %c0_i32, %c0_i32_0 : i32, i32
  }
}

</mosaic_0001>

<llo_original>
// kernel: tpu_custom_call.1
$region0: #{tpu_custom_call.1}
  #allocation0 [shape = 'u32[]', space=smem, size = 0x4, offset = 0x4, fixed_abs, tag = 'smem constant byte address 0x4 - core index']
  #allocation1 [shape = 'u32[144,128]{1,0:T(1,128)}', space=vmem, size = 0x12000, scoped, tag = 'internal scratch']
  %s0 = inlined_call_operand.hbm [shape: bf16[128,128], index: 0, kind: input, shape index: {}]
  %s1 = inlined_call_operand.vmem [shape: f32[128,1], index: 1, kind: input, shape index: {}]
  %s2 = inlined_call_operand.vmem [shape: f32[128,128], index: 2, kind: input, shape index: {}]
  %s3 = inlined_call_operand.hbm [shape: bf16[2,128,256], index: 3, kind: input, shape index: {}]
  %s4 = inlined_call_operand.vmem [shape: f32[2,1,128], index: 4, kind: input, shape index: {}]
  %s5 = inlined_call_operand.hbm [shape: f32[128,128], index: 5, kind: output, shape index: {}]
  %s6 = sld [smem:[#allocation0]]
  $region65: #{tpu_custom_call.1} parent=0
    _
  %s8 = ssub.s32 1, %s6
  %s9 = scalar_select 0, %s8, %s6
  $region1: #{tpu_custom_call.1} parent=0
    #allocation2 [shape = 'u8[32768]{0}', space=vmem, size = 0x8000, scoped, tag = 'input window, operand 0, single buffered']
    #allocation3 [shape = 's32[2]{0}', space=sflag, size = 0x8, scoped, tag = 'scoped memory for tpu_custom_call.1']
    #allocation4 [shape = 's32[2]{0}', space=sflag, size = 0x8, scoped, tag = 'scoped memory for tpu_custom_call.1']
    #allocation5 [shape = 'u8[131072]{0}', space=vmem, size = 0x20000, scoped, tag = 'input window, operand 3']
    #allocation6 [shape = 's32[2]{0}', space=sflag, size = 0x8, scoped, tag = 'scoped memory for tpu_custom_call.1']
    #allocation7 [shape = 'u8[65536]{0}', space=vmem, size = 0x10000, scoped, tag = 'output window, operand 0, single buffered']
    %10 = vsyncpa [#allocation3], 0
    %11 = vsyncpa [#allocation6], 0
    %s12 = scalar_lea.sflag [#allocation6], 1
    %13 = vsyncpa %s12, 0
    %14 = vsyncpa [#allocation4], 0
    loop: start=0, step=1, limit=4
    $region2: #{tpu_custom_call.1} parent=1 // loop_pre_header
      _
    $region3: #{tpu_custom_call.1} parent=1 // loop_header
      %s16 = sphi 0, %s20
      %p17 = scmp.ge.s32.totalorder %s16, 4
      %s24 = sphi 0, %s24
      %s26 = sphi 0, %s24
      %s27 = sphi 0, %s26
      %s41 = sphi 0, %s27
      %s45 = sphi 0, %s45
      %s47 = sphi 0, %s45
      %s48 = sphi 0, %s47
      %s62 = sphi 0, %s48
      %s66 = sphi 0, %s66
      %s68 = sphi 0, %s66
      %s69 = sphi 0, %s68
      %s83 = sphi 0, %s69
      %s89 = sphi 0, %s91
      %s92 = sphi 0, %s89
      %s93 = sphi 0, %s92
      %s109 = sphi 0, %s93
      %s115 = sphi 0, %s117
      %s118 = sphi 0, %s115
      %s119 = sphi 0, %s118
      %s135 = sphi 0, %s119
      %s139 = sphi 0, %s139
      %s141 = sphi 0, %s139
      %s142 = sphi 0, %s141
      %s156 = sphi 0, %s142
    $region4: #{tpu_custom_call.1} parent=1 // loop_header_branch
      %19 = sbr.rel (%p17) target = $region8
    $region5: #{tpu_custom_call.1} parent=1 // loop_body
      %s21 = ssub.s32 %s16, 1
      %s22 = ssub.s32 %s16, 2
      %s23 = sadd.s32 %s16, 1
      %s25 = sadd.s32 %s24, 1
      %p28 = scmp.eq.s32.totalorder %s16, 1
      %p29 = scmp.ne.s32.totalorder %s24, %s26
      %p30 = scmp.eq.s32.totalorder %s16, 0
      %p31 = por %p29, %p30
      %p32 = scmp.ne.s32.totalorder %s24, %s26
      %p33 = scmp.eq.s32.totalorder %s21, 1
      %p34 = por %p32, %p33
      %p35 = scmp.ne.s32.totalorder %s26, %s27
      %p36 = scmp.eq.s32.totalorder %s21, 0
      %p37 = por %p35, %p36
      %p38 = scmp.ne.s32.totalorder %s26, %s27
      %p39 = scmp.eq.s32.totalorder %s22, 1
      %p40 = por %p38, %p39
      %p42 = scmp.ne.s32.totalorder %s27, %s41
      %p43 = scmp.eq.s32.totalorder %s22, 0
      %p44 = por %p42, %p43
      %s46 = sadd.s32 %s45, 1
      %p49 = scmp.eq.s32.totalorder %s16, 1
      %p50 = scmp.ne.s32.totalorder %s45, %s47
      %p51 = scmp.eq.s32.totalorder %s16, 0
      %p52 = por %p50, %p51
      %p53 = scmp.ne.s32.totalorder %s45, %s47
      %p54 = scmp.eq.s32.totalorder %s21, 1
      %p55 = por %p53, %p54
      %p56 = scmp.ne.s32.totalorder %s47, %s48
      %p57 = scmp.eq.s32.totalorder %s21, 0
      %p58 = por %p56, %p57
      %p59 = scmp.ne.s32.totalorder %s47, %s48
      %p60 = scmp.eq.s32.totalorder %s22, 1
      %p61 = por %p59, %p60
      %p63 = scmp.ne.s32.totalorder %s48, %s62
      %p64 = scmp.eq.s32.totalorder %s22, 0
      %p65 = por %p63, %p64
      %s67 = sadd.s32 %s66, 1
      %p70 = scmp.eq.s32.totalorder %s16, 1
      %p71 = scmp.ne.s32.totalorder %s66, %s68
      %p72 = scmp.eq.s32.totalorder %s16, 0
      %p73 = por %p71, %p72
      %p74 = scmp.ne.s32.totalorder %s66, %s68
      %p75 = scmp.eq.s32.totalorder %s21, 1
      %p76 = por %p74, %p75
      %p77 = scmp.ne.s32.totalorder %s68, %s69
      %p78 = scmp.eq.s32.totalorder %s21, 0
      %p79 = por %p77, %p78
      %p80 = scmp.ne.s32.totalorder %s68, %s69
      %p81 = scmp.eq.s32.totalorder %s22, 1
      %p82 = por %p80, %p81
      %p84 = scmp.ne.s32.totalorder %s69, %s83
      %p85 = scmp.eq.s32.totalorder %s22, 0
      %p86 = por %p84, %p85
      %s87 = ssub.s32 %s16, %s23
      %p88 = scmp.eq.s32.totalorder %s87, 0
      %s90 = sadd.s32 %s89, 1
      %s91 = scalar_select %p88, %s89, %s90
      %p94 = pneg %p88
      %p95 = scmp.eq.s32.totalorder %s16, 1
      %p96 = por %p94, %p95
      %p97 = scmp.ne.s32.totalorder %s89, %s92
      %p98 = scmp.eq.s32.totalorder %s16, 0
      %p99 = por %p97, %p98
      %p100 = scmp.ne.s32.totalorder %s89, %s92
      %p101 = scmp.eq.s32.totalorder %s21, 1
      %p102 = por %p100, %p101
      %p103 = scmp.ne.s32.totalorder %s92, %s93
      %p104 = scmp.eq.s32.totalorder %s21, 0
      %p105 = por %p103, %p104
      %p106 = scmp.ne.s32.totalorder %s92, %s93
      %p107 = scmp.eq.s32.totalorder %s22, 1
      %p108 = por %p106, %p107
      %p110 = scmp.ne.s32.totalorder %s93, %s109
      %p111 = scmp.eq.s32.totalorder %s22, 0
      %p112 = por %p110, %p111
      %s113 = ssub.s32 %s16, %s23
      %p114 = scmp.eq.s32.totalorder %s113, 0
      %s116 = sadd.s32 %s115, 1
      %s117 = scalar_select %p114, %s115, %s116
      %p120 = pneg %p114
      %p121 = scmp.eq.s32.totalorder %s16, 1
      %p122 = por %p120, %p121
      %p123 = scmp.ne.s32.totalorder %s115, %s118
      %p124 = scmp.eq.s32.totalorder %s16, 0
      %p125 = por %p123, %p124
      %p126 = scmp.ne.s32.totalorder %s115, %s118
      %p127 = scmp.eq.s32.totalorder %s21, 1
      %p128 = por %p126, %p127
      %p129 = scmp.ne.s32.totalorder %s118, %s119
      %p130 = scmp.eq.s32.totalorder %s21, 0
      %p131 = por %p129, %p130
      %p132 = scmp.ne.s32.totalorder %s118, %s119
      %p133 = scmp.eq.s32.totalorder %s22, 1
      %p134 = por %p132, %p133
      %p136 = scmp.ne.s32.totalorder %s119, %s135
      %p137 = scmp.eq.s32.totalorder %s22, 0
      %p138 = por %p136, %p137
      %s140 = sadd.s32 %s139, 1
      %p143 = scmp.eq.s32.totalorder %s16, 1
      %p144 = scmp.ne.s32.totalorder %s139, %s141
      %p145 = scmp.eq.s32.totalorder %s16, 0
      %p146 = por %p144, %p145
      %p147 = scmp.ne.s32.totalorder %s139, %s141
      %p148 = scmp.eq.s32.totalorder %s21, 1
      %p149 = por %p147, %p148
      %p150 = scmp.ne.s32.totalorder %s141, %s142
      %p151 = scmp.eq.s32.totalorder %s21, 0
      %p152 = por %p150, %p151
      %p153 = scmp.ne.s32.totalorder %s141, %s142
      %p154 = scmp.eq.s32.totalorder %s22, 1
      %p155 = por %p153, %p154
      %p157 = scmp.ne.s32.totalorder %s142, %s156
      %p158 = scmp.eq.s32.totalorder %s22, 0
      %p159 = por %p157, %p158
      %p160 = scmp.le.s32.totalorder 1, %s16
      %p161 = scmp.lt.s32.totalorder %s16, 3
      %p162 = pnand %p160, %p161
      %p163 = pneg %p162
      // Predicated region
      $region9: #{tpu_custom_call.1} parent=5 // pred_check
        _
      $region10: #{tpu_custom_call.1} parent=5 // pred_check_branch
        %165 = sbr.rel (%p162) target = $region12
      $region11: #{tpu_custom_call.1} parent=5 // pred_region
        %s166 = ssub.s32 %s16, 1
        // Predicated region
        $region13: #{tpu_custom_call.1} parent=11 // pred_check
          %p167 = pneg %p37
        $region14: #{tpu_custom_call.1} parent=11 // pred_check_branch
          %169 = sbr.rel (%p167) target = $region16
        $region15: #{tpu_custom_call.1} parent=11 // pred_region
          %s171 = ssub.s32 1024, 1024
          %172 = vsyncadd [#allocation3], %s171
          %s173 = sshll.u32 [#allocation2], 4
          %s174 = int_to_ptr.vmem [resolvable:$true] %s173
          %179 = dma.hbm_to_vmem [thread:$0]  %s0, 1024, %s174, [#allocation3], 64, 64, 4
        $region16: #{tpu_custom_call.1} parent=11 // pred_fallthru
          _
        // Predicated region
        $region17: #{tpu_custom_call.1} parent=11 // pred_check
          %p180 = pneg %p58
        $region18: #{tpu_custom_call.1} parent=11 // pred_check_branch
          %182 = sbr.rel (%p180) target = $region20
        $region19: #{tpu_custom_call.1} parent=11 // pred_region
          _
        $region20: #{tpu_custom_call.1} parent=11 // pred_fallthru
          _
        // Predicated region
        $region21: #{tpu_custom_call.1} parent=11 // pred_check
          %p183 = pneg %p79
        $region22: #{tpu_custom_call.1} parent=11 // pred_check_branch
          %185 = sbr.rel (%p183) target = $region24
        $region23: #{tpu_custom_call.1} parent=11 // pred_region
          _
        $region24: #{tpu_custom_call.1} parent=11 // pred_fallthru
          _
      $region12: #{tpu_custom_call.1} parent=5 // pred_fallthru
        _
      %p186 = scmp.lt.s32.totalorder %s16, 2
      // Predicated region
      $region25: #{tpu_custom_call.1} parent=5 // pred_check
        %p187 = pneg %p186
      $region26: #{tpu_custom_call.1} parent=5 // pred_check_branch
        %189 = sbr.rel (%p187) target = $region28
      $region27: #{tpu_custom_call.1} parent=5 // pred_region
        // Predicated region
        $region29: #{tpu_custom_call.1} parent=27 // pred_check
          %p190 = pneg %p99
        $region30: #{tpu_custom_call.1} parent=27 // pred_check_branch
          %192 = sbr.rel (%p190) target = $region32
        $region31: #{tpu_custom_call.1} parent=27 // pred_region
          %s193 = sand.u32 %s89, 1
          %s194 = scalar_lea.sflag [#allocation6], %s193
          %s195 = sand.u32 %s89, 1
          %s196 = smul.addr %s195, 128
          %s197 = scalar_lea.vmem [#allocation5], %s196
          %s199 = ssub.s32 2048, 2048
          %200 = vsyncadd %s194, %s199
          %s201 = smul.addr %s16, 32
          %s202 = smul.addr %s201, 64
          %s203 = scalar_lea.hbm %s3, %s202
          %s204 = sshll.u32 %s197, 4
          %s205 = int_to_ptr.vmem [resolvable:$true] %s204
          %210 = dma.hbm_to_vmem [thread:$0]  %s203, 2048, %s205, %s194, 128, 128, 8
        $region32: #{tpu_custom_call.1} parent=27 // pred_fallthru
          _
        // Predicated region
        $region33: #{tpu_custom_call.1} parent=27 // pred_check
          %p211 = pneg %p125
        $region34: #{tpu_custom_call.1} parent=27 // pred_check_branch
          %213 = sbr.rel (%p211) target = $region36
        $region35: #{tpu_custom_call.1} parent=27 // pred_region
          %p214 = scmp.lt.s32.totalorder %s16, 1
          %s215 = scalar_select %p214, %s16, 1
          %s216 = scalar_lea.vmem %s4, %s215
        $region36: #{tpu_custom_call.1} parent=27 // pred_fallthru
          _
      $region28: #{tpu_custom_call.1} parent=5 // pred_fallthru
        _
      %p217 = scmp.le.s32.totalorder 1, %s16
      %p218 = scmp.lt.s32.totalorder %s16, 3
      %p219 = pnand %p217, %p218
      %p220 = pneg %p219
      // Predicated region
      $region37: #{tpu_custom_call.1} parent=5 // pred_check
        _
      $region38: #{tpu_custom_call.1} parent=5 // pred_check_branch
        %222 = sbr.rel (%p219) target = $region40
      $region39: #{tpu_custom_call.1} parent=5 // pred_region
        %s223 = ssub.s32 %s16, 1
        // Predicated region
        $region41: #{tpu_custom_call.1} parent=39 // pred_check
          %p224 = pneg %p37
        $region42: #{tpu_custom_call.1} parent=39 // pred_check_branch
          %226 = sbr.rel (%p224) target = $region44
        $region43: #{tpu_custom_call.1} parent=39 // pred_region
          %227 = dma.done [#allocation3], 1024
        $region44: #{tpu_custom_call.1} parent=39 // pred_fallthru
          _
        %s228 = sand.u32 %s92, 1
        %s229 = scalar_lea.sflag [#allocation6], %s228
        %s230 = sand.u32 %s92, 1
        %s231 = smul.addr %s230, 128
        %s232 = scalar_lea.vmem [#allocation5], %s231
        // Predicated region
        $region45: #{tpu_custom_call.1} parent=39 // pred_check
          %p233 = pneg %p105
        $region46: #{tpu_custom_call.1} parent=39 // pred_check_branch
          %235 = sbr.rel (%p233) target = $region48
        $region47: #{tpu_custom_call.1} parent=39 // pred_region
          %236 = dma.done %s229, 2048
        $region48: #{tpu_custom_call.1} parent=39 // pred_fallthru
          _
        %p237 = pneg %p37
        %p238 = pneg %p34
        %p239 = pneg %p58
        %p240 = pneg %p55
        %p241 = pneg %p79
        %p242 = pneg %p76
        %s243 = sand.u32 %s92, 1
        %s244 = scalar_lea.sflag [#allocation6], %s243
        %s245 = sand.u32 %s92, 1
        %s246 = smul.addr %s245, 128
        %s247 = scalar_lea.vmem [#allocation5], %s246
        %p248 = pneg %p105
        %p249 = pneg %p102
        %p250 = scmp.lt.s32.totalorder %s21, 1
        %s251 = scalar_select %p250, %s21, 1
        %s252 = scalar_lea.vmem %s4, %s251
        %p253 = pneg %p131
        %p254 = pneg %p128
        %p255 = pneg %p152
        %p256 = pneg %p149
        %p257 = scmp.lt.s32.totalorder %s21, 1
        %s258 = scalar_select %p257, %s21, 1
        %s259 = scalar_lea.vmem %s4, %s258
        %p261 = scmp.eq.s32.totalorder %s21, 0
        // Predicated region
        $region49: #{tpu_custom_call.1} parent=39 // pred_check
          %p262 = pneg %p261
        $region50: #{tpu_custom_call.1} parent=39 // pred_check_branch
          %264 = sbr.rel (%p262) target = $region52
        $region51: #{tpu_custom_call.1} parent=39 // pred_region
          %v265 = vld [vmem:[%s2] sm:$0xff]
          %v266 = vld [vmem:[%s2 + $0x8] sm:$0xff]
          %v267 = vld [vmem:[%s2 + $0x10] sm:$0xff]
          %v268 = vld [vmem:[%s2 + $0x18] sm:$0xff]
          %v269 = vld [vmem:[%s2 + $0x20] sm:$0xff]
          %v270 = vld [vmem:[%s2 + $0x28] sm:$0xff]
          %v271 = vld [vmem:[%s2 + $0x30] sm:$0xff]
          %v272 = vld [vmem:[%s2 + $0x38] sm:$0xff]
          %v273 = vld [vmem:[%s2 + $0x40] sm:$0xff]
          %v274 = vld [vmem:[%s2 + $0x48] sm:$0xff]
          %v275 = vld [vmem:[%s2 + $0x50] sm:$0xff]
          %v276 = vld [vmem:[%s2 + $0x58] sm:$0xff]
          %v277 = vld [vmem:[%s2 + $0x60] sm:$0xff]
          %v278 = vld [vmem:[%s2 + $0x68] sm:$0xff]
          %v279 = vld [vmem:[%s2 + $0x70] sm:$0xff]
          %v280 = vld [vmem:[%s2 + $0x78] sm:$0xff]
          %281 = vst [vmem:[#allocation7] sm:$0xff] %v265
          %282 = vst [vmem:[#allocation7 + $0x8] sm:$0xff] %v266
          %283 = vst [vmem:[#allocation7 + $0x10] sm:$0xff] %v267
          %284 = vst [vmem:[#allocation7 + $0x18] sm:$0xff] %v268
          %285 = vst [vmem:[#allocation7 + $0x20] sm:$0xff] %v269
          %286 = vst [vmem:[#allocation7 + $0x28] sm:$0xff] %v270
          %287 = vst [vmem:[#allocation7 + $0x30] sm:$0xff] %v271
          %288 = vst [vmem:[#allocation7 + $0x38] sm:$0xff] %v272
          %289 = vst [vmem:[#allocation7 + $0x40] sm:$0xff] %v273
          %290 = vst [vmem:[#allocation7 + $0x48] sm:$0xff] %v274
          %291 = vst [vmem:[#allocation7 + $0x50] sm:$0xff] %v275
          %292 = vst [vmem:[#allocation7 + $0x58] sm:$0xff] %v276
          %293 = vst [vmem:[#allocation7 + $0x60] sm:$0xff] %v277
          %294 = vst [vmem:[#allocation7 + $0x68] sm:$0xff] %v278
          %295 = vst [vmem:[#allocation7 + $0x70] sm:$0xff] %v279
          %296 = vst [vmem:[#allocation7 + $0x78] sm:$0xff] %v280
        $region52: #{tpu_custom_call.1} parent=39 // pred_fallthru
          _
        %v297 = vld [vmem:[#allocation7] sm:$0xff]
        %v298 = vld [vmem:[#allocation7 + $0x8] sm:$0xff]
        %v299 = vld [vmem:[#allocation7 + $0x10] sm:$0xff]
        %v300 = vld [vmem:[#allocation7 + $0x18] sm:$0xff]
        %v301 = vld [vmem:[#allocation7 + $0x20] sm:$0xff]
        %v302 = vld [vmem:[#allocation7 + $0x28] sm:$0xff]
        %v303 = vld [vmem:[#allocation7 + $0x30] sm:$0xff]
        %v304 = vld [vmem:[#allocation7 + $0x38] sm:$0xff]
        %v305 = vld [vmem:[#allocation7 + $0x40] sm:$0xff]
        %v306 = vld [vmem:[#allocation7 + $0x48] sm:$0xff]
        %v307 = vld [vmem:[#allocation7 + $0x50] sm:$0xff]
        %v308 = vld [vmem:[#allocation7 + $0x58] sm:$0xff]
        %v309 = vld [vmem:[#allocation7 + $0x60] sm:$0xff]
        %v310 = vld [vmem:[#allocation7 + $0x68] sm:$0xff]
        %v311 = vld [vmem:[#allocation7 + $0x70] sm:$0xff]
        %v312 = vld [vmem:[#allocation7 + $0x78] sm:$0xff]
        %v313 = vld [vmem:[#allocation2] sm:$0xf]
        %v314 = vld [vmem:[#allocation2 + $0x4] sm:$0xf]
        %v315 = vld [vmem:[#allocation2 + $0x8] sm:$0xf]
        %v316 = vld [vmem:[#allocation2 + $0xc] sm:$0xf]
        %v317 = vld [vmem:[#allocation2 + $0x10] sm:$0xf]
        %v318 = vld [vmem:[#allocation2 + $0x14] sm:$0xf]
        %v319 = vld [vmem:[#allocation2 + $0x18] sm:$0xf]
        %v320 = vld [vmem:[#allocation2 + $0x1c] sm:$0xf]
        %v321 = vld [vmem:[#allocation2 + $0x20] sm:$0xf]
        %v322 = vld [vmem:[#allocation2 + $0x24] sm:$0xf]
        %v323 = vld [vmem:[#allocation2 + $0x28] sm:$0xf]
        %v324 = vld [vmem:[#allocation2 + $0x2c] sm:$0xf]
        %v325 = vld [vmem:[#allocation2 + $0x30] sm:$0xf]
        %v326 = vld [vmem:[#allocation2 + $0x34] sm:$0xf]
        %v327 = vld [vmem:[#allocation2 + $0x38] sm:$0xf]
        %v328 = vld [vmem:[#allocation2 + $0x3c] sm:$0xf]
        %v329 = vld [vmem:[%s1] sm:$0xff]
        %v330 = vld [vmem:[%s1 + $0x8] sm:$0xff]
        %v331 = vld [vmem:[%s1 + $0x10] sm:$0xff]
        %v332 = vld [vmem:[%s1 + $0x18] sm:$0xff]
        %v333 = vld [vmem:[%s1 + $0x20] sm:$0xff]
        %v334 = vld [vmem:[%s1 + $0x28] sm:$0xff]
        %v335 = vld [vmem:[%s1 + $0x30] sm:$0xff]
        %v336 = vld [vmem:[%s1 + $0x38] sm:$0xff]
        %v337 = vld [vmem:[%s1 + $0x40] sm:$0xff]
        %v338 = vld [vmem:[%s1 + $0x48] sm:$0xff]
        %v339 = vld [vmem:[%s1 + $0x50] sm:$0xff]
        %v340 = vld [vmem:[%s1 + $0x58] sm:$0xff]
        %v341 = vld [vmem:[%s1 + $0x60] sm:$0xff]
        %v342 = vld [vmem:[%s1 + $0x68] sm:$0xff]
        %v343 = vld [vmem:[%s1 + $0x70] sm:$0xff]
        %v344 = vld [vmem:[%s1 + $0x78] sm:$0xff]
        %v345 = vld [vmem:[%s232] sm:$0xff]
        %v346 = vld [vmem:[%s232 + $0x8] sm:$0xff]
        %v347 = vld [vmem:[%s232 + $0x10] sm:$0xff]
        %v348 = vld [vmem:[%s232 + $0x18] sm:$0xff]
        %v349 = vld [vmem:[%s232 + $0x20] sm:$0xff]
        %v350 = vld [vmem:[%s232 + $0x28] sm:$0xff]
        %v351 = vld [vmem:[%s232 + $0x30] sm:$0xff]
        %v352 = vld [vmem:[%s232 + $0x38] sm:$0xff]
        %v353 = vld [vmem:[%s232 + $0x40] sm:$0xff]
        %v354 = vld [vmem:[%s232 + $0x48] sm:$0xff]
        %v355 = vld [vmem:[%s232 + $0x50] sm:$0xff]
        %v356 = vld [vmem:[%s232 + $0x58] sm:$0xff]
        %v357 = vld [vmem:[%s232 + $0x60] sm:$0xff]
        %v358 = vld [vmem:[%s232 + $0x68] sm:$0xff]
        %v359 = vld [vmem:[%s232 + $0x70] sm:$0xff]
        %v360 = vld [vmem:[%s232 + $0x78] sm:$0xff]
        %v361 = vld [vmem:[%s259] sm:$0x1]
        %v362 = vpack.c.bf16 %v298, %v297
        %v363 = vpack.c.bf16 %v300, %v299
        %v364 = vpack.c.bf16 %v302, %v301
        %v365 = vpack.c.bf16 %v304, %v303
        %v366 = vpack.c.bf16 %v306, %v305
        %v367 = vpack.c.bf16 %v308, %v307
        %v368 = vpack.c.bf16 %v310, %v309
        %v369 = vpack.c.bf16 %v312, %v311
        %v386 = vunpack.c.l.b16 %v345
        %v387 = vunpack.c.h.b16 %v345
        %v388 = vunpack.c.l.b16 %v346
        %v389 = vunpack.c.h.b16 %v346
        %v390 = vunpack.c.l.b16 %v347
        %v391 = vunpack.c.h.b16 %v347
        %v392 = vunpack.c.l.b16 %v348
        %v393 = vunpack.c.h.b16 %v348
        %v394 = vunpack.c.l.b16 %v349
        %v395 = vunpack.c.h.b16 %v349
        %v396 = vunpack.c.l.b16 %v350
        %v397 = vunpack.c.h.b16 %v350
        %v398 = vunpack.c.l.b16 %v351
        %v399 = vunpack.c.h.b16 %v351
        %v400 = vunpack.c.l.b16 %v352
        %v401 = vunpack.c.h.b16 %v352
        %v402 = vunpack.c.l.b16 %v353
        %v403 = vunpack.c.h.b16 %v353
        %v404 = vunpack.c.l.b16 %v354
        %v405 = vunpack.c.h.b16 %v354
        %v406 = vunpack.c.l.b16 %v355
        %v407 = vunpack.c.h.b16 %v355
        %v408 = vunpack.c.l.b16 %v356
        %v409 = vunpack.c.h.b16 %v356
        %v410 = vunpack.c.l.b16 %v357
        %v411 = vunpack.c.h.b16 %v357
        %v412 = vunpack.c.l.b16 %v358
        %v413 = vunpack.c.h.b16 %v358
        %v414 = vunpack.c.l.b16 %v359
        %v415 = vunpack.c.h.b16 %v359
        %v416 = vunpack.c.l.b16 %v360
        %v417 = vunpack.c.h.b16 %v360
        %v418 = vpack.c.b16 %v388, %v386
        %v419 = vpack.c.b16 %v389, %v387
        %v420 = vpack.c.b16 %v392, %v390
        %v421 = vpack.c.b16 %v393, %v391
        %v422 = vpack.c.b16 %v396, %v394
        %v423 = vpack.c.b16 %v397, %v395
        %v424 = vpack.c.b16 %v400, %v398
        %v425 = vpack.c.b16 %v401, %v399
        %v426 = vpack.c.b16 %v404, %v402
        %v427 = vpack.c.b16 %v405, %v403
        %v428 = vpack.c.b16 %v408, %v406
        %v429 = vpack.c.b16 %v409, %v407
        %v430 = vpack.c.b16 %v412, %v410
        %v431 = vpack.c.b16 %v413, %v411
        %v432 = vpack.c.b16 %v416, %v414
        %v433 = vpack.c.b16 %v417, %v415
        %450 = vmatprep.subr.bf16.mxu0 %v419
        %451 = vmatpush1.bf16.msra.mxu0 %v418
        %452 = vmatprep.subr.bf16.mxu0 %v421
        %453 = vmatpush1.bf16.msra.mxu0 %v420
        %454 = vmatprep.subr.bf16.mxu0 %v423
        %455 = vmatpush1.bf16.msra.mxu0 %v422
        %456 = vmatprep.subr.bf16.mxu0 %v425
        %457 = vmatpush1.bf16.msra.mxu0 %v424
        %458 = vmatprep.subr.bf16.mxu0 %v427
        %459 = vmatpush1.bf16.msra.mxu0 %v426
        %460 = vmatprep.subr.bf16.mxu0 %v429
        %461 = vmatpush1.bf16.msra.mxu0 %v428
        %462 = vmatprep.subr.bf16.mxu0 %v431
        %463 = vmatpush1.bf16.msra.mxu0 %v430
        %464 = vmatprep.subr.bf16.mxu0 %v433
        %465 = vmatpush1.bf16.msra.mxu0 %v432
        %466 = vmatprep.subr.bf16.mxu0 0
        %467 = vmatpush1.bf16.msra.mxu0 0
        %468 = vmatprep.subr.bf16.mxu0 0
        %469 = vmatpush1.bf16.msra.mxu0 0
        %470 = vmatprep.subr.bf16.mxu0 0
        %471 = vmatpush1.bf16.msra.mxu0 0
        %472 = vmatprep.subr.bf16.mxu0 0
        %473 = vmatpush1.bf16.msra.mxu0 0
        %474 = vmatprep.subr.bf16.mxu0 0
        %475 = vmatpush1.bf16.msra.mxu0 0
        %476 = vmatprep.subr.bf16.mxu0 0
        %477 = vmatpush1.bf16.msra.mxu0 0
        %478 = vmatprep.subr.bf16.mxu0 0
        %479 = vmatpush1.bf16.msra.mxu0 0
        %480 = vmatprep.subr.bf16.mxu0 0
        %481 = vmatpush1.bf16.msra.mxu0 0
        %482 = vmatprep.mubr.bf16.mxu0 0
        %483 = vmatmul.mubr.bf16.gmra.mrb[0].mxu0 %v362
        %v484 = vpop.f32.mrb[0].mxu0
        %v485 = vadd.f32 0.0, %v484
        %v486 = vpop.f32.mrb[0].mxu0
        %v487 = vadd.f32 0.0, %v486
        %v488 = vpop.f32.mrb[0].mxu0
        %v489 = vadd.f32 0.0, %v488
        %v490 = vpop.f32.mrb[0].mxu0
        %v491 = vadd.f32 0.0, %v490
        %492 = vmatprep.mubr.bf16.mxu0 0
        %493 = vmatmul.mubr.bf16.gmra.mrb[0].mxu0 %v363
        %v494 = vpop.f32.mrb[0].mxu0
        %v495 = vadd.f32 0.0, %v494
        %v496 = vpop.f32.mrb[0].mxu0
        %v497 = vadd.f32 0.0, %v496
        %v498 = vpop.f32.mrb[0].mxu0
        %v499 = vadd.f32 0.0, %v498
        %v500 = vpop.f32.mrb[0].mxu0
        %v501 = vadd.f32 0.0, %v500
        %502 = vmatprep.mubr.bf16.mxu0 0
        %503 = vmatmul.mubr.bf16.gmra.mrb[0].mxu0 %v364
        %v504 = vpop.f32.mrb[0].mxu0
        %v505 = vadd.f32 0.0, %v504
        %v506 = vpop.f32.mrb[0].mxu0
        %v507 = vadd.f32 0.0, %v506
        %v508 = vpop.f32.mrb[0].mxu0
        %v509 = vadd.f32 0.0, %v508
        %v510 = vpop.f32.mrb[0].mxu0
        %v511 = vadd.f32 0.0, %v510
        %512 = vmatprep.mubr.bf16.mxu0 0
        %513 = vmatmul.mubr.bf16.gmra.mrb[0].mxu0 %v365
        %v514 = vpop.f32.mrb[0].mxu0
        %v515 = vadd.f32 0.0, %v514
        %v516 = vpop.f32.mrb[0].mxu0
        %v517 = vadd.f32 0.0, %v516
        %v518 = vpop.f32.mrb[0].mxu0
        %v519 = vadd.f32 0.0, %v518
        %v520 = vpop.f32.mrb[0].mxu0
        %v521 = vadd.f32 0.0, %v520
        %522 = vmatprep.mubr.bf16.mxu0 0
        %523 = vmatmul.mubr.bf16.gmra.mrb[0].mxu0 %v366
        %v524 = vpop.f32.mrb[0].mxu0
        %v525 = vadd.f32 0.0, %v524
        %v526 = vpop.f32.mrb[0].mxu0
        %v527 = vadd.f32 0.0, %v526
        %v528 = vpop.f32.mrb[0].mxu0
        %v529 = vadd.f32 0.0, %v528
        %v530 = vpop.f32.mrb[0].mxu0
        %v531 = vadd.f32 0.0, %v530
        %532 = vmatprep.mubr.bf16.mxu0 0
        %533 = vmatmul.mubr.bf16.gmra.mrb[0].mxu0 %v367
        %v534 = vpop.f32.mrb[0].mxu0
        %v535 = vadd.f32 0.0, %v534
        %v536 = vpop.f32.mrb[0].mxu0
        %v537 = vadd.f32 0.0, %v536
        %v538 = vpop.f32.mrb[0].mxu0
        %v539 = vadd.f32 0.0, %v538
        %v540 = vpop.f32.mrb[0].mxu0
        %v541 = vadd.f32 0.0, %v540
        %542 = vmatprep.mubr.bf16.mxu0 0
        %543 = vmatmul.mubr.bf16.gmra.mrb[0].mxu0 %v368
        %v544 = vpop.f32.mrb[0].mxu0
        %v545 = vadd.f32 0.0, %v544
        %v546 = vpop.f32.mrb[0].mxu0
        %v547 = vadd.f32 0.0, %v546
        %v548 = vpop.f32.mrb[0].mxu0
        %v549 = vadd.f32 0.0, %v548
        %v550 = vpop.f32.mrb[0].mxu0
        %v551 = vadd.f32 0.0, %v550
        %552 = vmatprep.mubr.bf16.mxu0 0
        %553 = vmatmul.mubr.bf16.gmra.mrb[0].mxu0 %v369
        %v554 = vpop.f32.mrb[0].mxu0
        %v555 = vadd.f32 0.0, %v554
        %v556 = vpop.f32.mrb[0].mxu0
        %v557 = vadd.f32 0.0, %v556
        %v558 = vpop.f32.mrb[0].mxu0
        %v559 = vadd.f32 0.0, %v558
        %v560 = vpop.f32.mrb[0].mxu0
        %v561 = vadd.f32 0.0, %v560
        %562 = vdwg.mxu0
        %v563 = vpack.c.bf16 %v489, %v485
        %v564 = vpack.c.bf16 %v499, %v495
        %v565 = vpack.c.bf16 %v509, %v505
        %v566 = vpack.c.bf16 %v519, %v515
        %v567 = vpack.c.bf16 %v529, %v525
        %v568 = vpack.c.bf16 %v539, %v535
        %v569 = vpack.c.bf16 %v549, %v545
        %v570 = vpack.c.bf16 %v559, %v555
        %v587 = vunpack.c.l.b16 %v313
        %v588 = vunpack.c.l.b16 %v314
        %v589 = vunpack.c.l.b16 %v315
        %v590 = vunpack.c.l.b16 %v316
        %v591 = vunpack.c.l.b16 %v317
        %v592 = vunpack.c.l.b16 %v318
        %v593 = vunpack.c.l.b16 %v319
        %v594 = vunpack.c.l.b16 %v320
        %v595 = vunpack.c.l.b16 %v321
        %v596 = vunpack.c.l.b16 %v322
        %v597 = vunpack.c.l.b16 %v323
        %v598 = vunpack.c.l.b16 %v324
        %v599 = vunpack.c.l.b16 %v325
        %v600 = vunpack.c.l.b16 %v326
        %v601 = vunpack.c.l.b16 %v327
        %v602 = vunpack.c.l.b16 %v328
        %v603 = vpack.c.b16 %v588, %v587
        %v604 = vpack.c.b16 %v590, %v589
        %v605 = vpack.c.b16 %v592, %v591
        %v606 = vpack.c.b16 %v594, %v593
        %v607 = vpack.c.b16 %v596, %v595
        %v608 = vpack.c.b16 %v598, %v597
        %v609 = vpack.c.b16 %v600, %v599
        %v610 = vpack.c.b16 %v602, %v601
        %619 = vmatprep.subr.bf16.mxu0 0
        %620 = vmatpush1.bf16.msra.mxu0 %v563
        %621 = vmatprep.subr.bf16.mxu0 0
        %622 = vmatpush1.bf16.msra.mxu0 %v564
        %623 = vmatprep.subr.bf16.mxu0 0
        %624 = vmatpush1.bf16.msra.mxu0 %v565
        %625 = vmatprep.subr.bf16.mxu0 0
        %626 = vmatpush1.bf16.msra.mxu0 %v566
        %627 = vmatprep.subr.bf16.mxu0 0
        %628 = vmatpush1.bf16.msra.mxu0 %v567
        %629 = vmatprep.subr.bf16.mxu0 0
        %630 = vmatpush1.bf16.msra.mxu0 %v568
        %631 = vmatprep.subr.bf16.mxu0 0
        %632 = vmatpush1.bf16.msra.mxu0 %v569
        %633 = vmatprep.subr.bf16.mxu0 0
        %634 = vmatpush1.bf16.msra.mxu0 %v570
        %635 = vmatprep.subr.bf16.mxu0 0
        %636 = vmatpush1.bf16.msra.mxu0 0
        %637 = vmatprep.subr.bf16.mxu0 0
        %638 = vmatpush1.bf16.msra.mxu0 0
        %639 = vmatprep.subr.bf16.mxu0 0
        %640 = vmatpush1.bf16.msra.mxu0 0
        %641 = vmatprep.subr.bf16.mxu0 0
        %642 = vmatpush1.bf16.msra.mxu0 0
        %643 = vmatprep.subr.bf16.mxu0 0
        %644 = vmatpush1.bf16.msra.mxu0 0
        %645 = vmatprep.subr.bf16.mxu0 0
        %646 = vmatpush1.bf16.msra.mxu0 0
        %647 = vmatprep.subr.bf16.mxu0 0
        %648 = vmatpush1.bf16.msra.mxu0 0
        %649 = vmatprep.subr.bf16.mxu0 0
        %650 = vmatpush1.bf16.msra.mxu0 0
        %651 = vmatprep.mubr.bf16.mxu0 0
        %652 = vmatmul.mubr.bf16.gmra.mrb[0].mxu0 %v603
        %v653 = vpop.f32.mrb[0].mxu0
        %v654 = vadd.f32 0.0, %v653
        %v655 = vpop.f32.mrb[0].mxu0
        %v656 = vpop.f32.mrb[0].mxu0
        %v657 = vadd.f32 0.0, %v656
        %v658 = vpop.f32.mrb[0].mxu0
        %659 = vmatprep.mubr.bf16.mxu0 0
        %660 = vmatmul.mubr.bf16.gmra.mrb[0].mxu0 %v604
        %v661 = vpop.f32.mrb[0].mxu0
        %v662 = vadd.f32 0.0, %v661
        %v663 = vpop.f32.mrb[0].mxu0
        %v664 = vpop.f32.mrb[0].mxu0
        %v665 = vadd.f32 0.0, %v664
        %v666 = vpop.f32.mrb[0].mxu0
        %667 = vmatprep.mubr.bf16.mxu0 0
        %668 = vmatmul.mubr.bf16.gmra.mrb[0].mxu0 %v605
        %v669 = vpop.f32.mrb[0].mxu0
        %v670 = vadd.f32 0.0, %v669
        %v671 = vpop.f32.mrb[0].mxu0
        %v672 = vpop.f32.mrb[0].mxu0
        %v673 = vadd.f32 0.0, %v672
        %v674 = vpop.f32.mrb[0].mxu0
        %675 = vmatprep.mubr.bf16.mxu0 0
        %676 = vmatmul.mubr.bf16.gmra.mrb[0].mxu0 %v606
        %v677 = vpop.f32.mrb[0].mxu0
        %v678 = vadd.f32 0.0, %v677
        %v679 = vpop.f32.mrb[0].mxu0
        %v680 = vpop.f32.mrb[0].mxu0
        %v681 = vadd.f32 0.0, %v680
        %v682 = vpop.f32.mrb[0].mxu0
        %683 = vmatprep.mubr.bf16.mxu0 0
        %684 = vmatmul.mubr.bf16.gmra.mrb[0].mxu0 %v607
        %v685 = vpop.f32.mrb[0].mxu0
        %v686 = vadd.f32 0.0, %v685
        %v687 = vpop.f32.mrb[0].mxu0
        %v688 = vpop.f32.mrb[0].mxu0
        %v689 = vadd.f32 0.0, %v688
        %v690 = vpop.f32.mrb[0].mxu0
        %691 = vmatprep.mubr.bf16.mxu0 0
        %692 = vmatmul.mubr.bf16.gmra.mrb[0].mxu0 %v608
        %v693 = vpop.f32.mrb[0].mxu0
        %v694 = vadd.f32 0.0, %v693
        %v695 = vpop.f32.mrb[0].mxu0
        %v696 = vpop.f32.mrb[0].mxu0
        %v697 = vadd.f32 0.0, %v696
        %v698 = vpop.f32.mrb[0].mxu0
        %699 = vmatprep.mubr.bf16.mxu0 0
        %700 = vmatmul.mubr.bf16.gmra.mrb[0].mxu0 %v609
        %v701 = vpop.f32.mrb[0].mxu0
        %v702 = vadd.f32 0.0, %v701
        %v703 = vpop.f32.mrb[0].mxu0
        %v704 = vpop.f32.mrb[0].mxu0
        %v705 = vadd.f32 0.0, %v704
        %v706 = vpop.f32.mrb[0].mxu0
        %707 = vmatprep.mubr.bf16.mxu0 0
        %708 = vmatmul.mubr.bf16.gmra.mrb[0].mxu0 %v610
        %v709 = vpop.f32.mrb[0].mxu0
        %v710 = vadd.f32 0.0, %v709
        %v711 = vpop.f32.mrb[0].mxu0
        %v712 = vpop.f32.mrb[0].mxu0
        %v713 = vadd.f32 0.0, %v712
        %v714 = vpop.f32.mrb[0].mxu0
        %715 = vdwg.mxu0
        %717 = vset.pattern.permute.xlu0 0
        %718 = vperm.xlu0 %717, %v329
        %v719 = vpop.permute.xlu0 %718
        %722 = vset.pattern.permute.xlu0 0
        %723 = vperm.xlu0 %722, %v330
        %v724 = vpop.permute.xlu0 %723
        %727 = vset.pattern.permute.xlu0 0
        %728 = vperm.xlu0 %727, %v331
        %v729 = vpop.permute.xlu0 %728
        %732 = vset.pattern.permute.xlu0 0
        %733 = vperm.xlu0 %732, %v332
        %v734 = vpop.permute.xlu0 %733
        %737 = vset.pattern.permute.xlu0 0
        %738 = vperm.xlu0 %737, %v333
        %v739 = vpop.permute.xlu0 %738
        %742 = vset.pattern.permute.xlu0 0
        %743 = vperm.xlu0 %742, %v334
        %v744 = vpop.permute.xlu0 %743
        %747 = vset.pattern.permute.xlu0 0
        %748 = vperm.xlu0 %747, %v335
        %v749 = vpop.permute.xlu0 %748
        %752 = vset.pattern.permute.xlu0 0
        %753 = vperm.xlu0 %752, %v336
        %v754 = vpop.permute.xlu0 %753
        %757 = vset.pattern.permute.xlu0 0
        %758 = vperm.xlu0 %757, %v337
        %v759 = vpop.permute.xlu0 %758
        %762 = vset.pattern.permute.xlu0 0
        %763 = vperm.xlu0 %762, %v338
        %v764 = vpop.permute.xlu0 %763
        %767 = vset.pattern.permute.xlu0 0
        %768 = vperm.xlu0 %767, %v339
        %v769 = vpop.permute.xlu0 %768
        %772 = vset.pattern.permute.xlu0 0
        %773 = vperm.xlu0 %772, %v340
        %v774 = vpop.permute.xlu0 %773
        %777 = vset.pattern.permute.xlu0 0
        %778 = vperm.xlu0 %777, %v341
        %v779 = vpop.permute.xlu0 %778
        %782 = vset.pattern.permute.xlu0 0
        %783 = vperm.xlu0 %782, %v342
        %v784 = vpop.permute.xlu0 %783
        %787 = vset.pattern.permute.xlu0 0
        %788 = vperm.xlu0 %787, %v343
        %v789 = vpop.permute.xlu0 %788
        %792 = vset.pattern.permute.xlu0 0
        %793 = vperm.xlu0 %792, %v344
        %v794 = vpop.permute.xlu0 %793
        %v796 = vmul.f32 %v654, %v719
        %v797 = vmul.f32 %v657, %v724
        %v798 = vmul.f32 %v662, %v729
        %v799 = vmul.f32 %v665, %v734
        %v800 = vmul.f32 %v670, %v739
        %v801 = vmul.f32 %v673, %v744
        %v802 = vmul.f32 %v678, %v749
        %v803 = vmul.f32 %v681, %v754
        %v804 = vmul.f32 %v686, %v759
        %v805 = vmul.f32 %v689, %v764
        %v806 = vmul.f32 %v694, %v769
        %v807 = vmul.f32 %v697, %v774
        %v808 = vmul.f32 %v702, %v779
        %v809 = vmul.f32 %v705, %v784
        %v810 = vmul.f32 %v710, %v789
        %v811 = vmul.f32 %v713, %v794
        %v812 = vadd.f32 %v796, %v487
        %v813 = vadd.f32 %v797, %v491
        %v814 = vadd.f32 %v798, %v497
        %v815 = vadd.f32 %v799, %v501
        %v816 = vadd.f32 %v800, %v507
        %v817 = vadd.f32 %v801, %v511
        %v818 = vadd.f32 %v802, %v517
        %v819 = vadd.f32 %v803, %v521
        %v820 = vadd.f32 %v804, %v527
        %v821 = vadd.f32 %v805, %v531
        %v822 = vadd.f32 %v806, %v537
        %v823 = vadd.f32 %v807, %v541
        %v824 = vadd.f32 %v808, %v547
        %v825 = vadd.f32 %v809, %v551
        %v826 = vadd.f32 %v810, %v557
        %v827 = vadd.f32 %v811, %v561
        %v829 = vlaneseq
        %v830 = vshrl.u32 %v829, 7
        %v831 = vsub.s32 0, %v830
        %v832 = vrot.slane %v361, %v831
        %v834 = vadd.f32 %v812, %v832
        %v835 = vadd.f32 %v813, %v832
        %v836 = vadd.f32 %v814, %v832
        %v837 = vadd.f32 %v815, %v832
        %v838 = vadd.f32 %v816, %v832
        %v839 = vadd.f32 %v817, %v832
        %v840 = vadd.f32 %v818, %v832
        %v841 = vadd.f32 %v819, %v832
        %v842 = vadd.f32 %v820, %v832
        %v843 = vadd.f32 %v821, %v832
        %v844 = vadd.f32 %v822, %v832
        %v845 = vadd.f32 %v823, %v832
        %v846 = vadd.f32 %v824, %v832
        %v847 = vadd.f32 %v825, %v832
        %v848 = vadd.f32 %v826, %v832
        %v849 = vadd.f32 %v827, %v832
        %v850 = vmax.f32 %v834, 0.0
        %v851 = vmax.f32 %v835, 0.0
        %v852 = vmax.f32 %v836, 0.0
        %v853 = vmax.f32 %v837, 0.0
        %v854 = vmax.f32 %v838, 0.0
        %v855 = vmax.f32 %v839, 0.0
        %v856 = vmax.f32 %v840, 0.0
        %v857 = vmax.f32 %v841, 0.0
        %v858 = vmax.f32 %v842, 0.0
        %v859 = vmax.f32 %v843, 0.0
        %v860 = vmax.f32 %v844, 0.0
        %v861 = vmax.f32 %v845, 0.0
        %v862 = vmax.f32 %v846, 0.0
        %v863 = vmax.f32 %v847, 0.0
        %v864 = vmax.f32 %v848, 0.0
        %v865 = vmax.f32 %v849, 0.0
        %866 = vst [vmem:[#allocation7] sm:$0xff] %v850
        %867 = vst [vmem:[#allocation7 + $0x8] sm:$0xff] %v851
        %868 = vst [vmem:[#allocation7 + $0x10] sm:$0xff] %v852
        %869 = vst [vmem:[#allocation7 + $0x18] sm:$0xff] %v853
        %870 = vst [vmem:[#allocation7 + $0x20] sm:$0xff] %v854
        %871 = vst [vmem:[#allocation7 + $0x28] sm:$0xff] %v855
        %872 = vst [vmem:[#allocation7 + $0x30] sm:$0xff] %v856
        %873 = vst [vmem:[#allocation7 + $0x38] sm:$0xff] %v857
        %874 = vst [vmem:[#allocation7 + $0x40] sm:$0xff] %v858
        %875 = vst [vmem:[#allocation7 + $0x48] sm:$0xff] %v859
        %876 = vst [vmem:[#allocation7 + $0x50] sm:$0xff] %v860
        %877 = vst [vmem:[#allocation7 + $0x58] sm:$0xff] %v861
        %878 = vst [vmem:[#allocation7 + $0x60] sm:$0xff] %v862
        %879 = vst [vmem:[#allocation7 + $0x68] sm:$0xff] %v863
        %880 = vst [vmem:[#allocation7 + $0x70] sm:$0xff] %v864
        %881 = vst [vmem:[#allocation7 + $0x78] sm:$0xff] %v865
        // Predicated region
        $region53: #{tpu_custom_call.1} parent=39 // pred_check
          %p882 = pneg %p149
        $region54: #{tpu_custom_call.1} parent=39 // pred_check_branch
          %884 = sbr.rel (%p882) target = $region56
        $region55: #{tpu_custom_call.1} parent=39 // pred_region
          %s886 = ssub.s32 2048, 2048
          %887 = vsyncadd [#allocation4], %s886
          %s888 = sshll.u32 [#allocation7], 4
          %s889 = int_to_ptr.vmem [resolvable:$true] %s888
          %894 = dma.vmem_to_hbm [thread:$0]  %s889, 2048, %s5, [#allocation4], 128, 128, 8
        $region56: #{tpu_custom_call.1} parent=39 // pred_fallthru
          _
        // Predicated region
        $region57: #{tpu_custom_call.1} parent=39 // pred_check
          %p895 = pneg %p149
        $region58: #{tpu_custom_call.1} parent=39 // pred_check_branch
          %897 = sbr.rel (%p895) target = $region60
        $region59: #{tpu_custom_call.1} parent=39 // pred_region
          %898 = dma.done [#allocation4], 2048
        $region60: #{tpu_custom_call.1} parent=39 // pred_fallthru
          _
      $region40: #{tpu_custom_call.1} parent=5 // pred_fallthru
        _
      %p899 = scmp.le.s32.totalorder 2, %s16
      // Predicated region
      $region61: #{tpu_custom_call.1} parent=5 // pred_check
        %p900 = pneg %p899
      $region62: #{tpu_custom_call.1} parent=5 // pred_check_branch
        %902 = sbr.rel (%p900) target = $region64
      $region63: #{tpu_custom_call.1} parent=5 // pred_region
        %s903 = ssub.s32 %s16, 2
      $region64: #{tpu_custom_call.1} parent=5 // pred_fallthru
        _
    $region6: #{tpu_custom_call.1} parent=1 // loop_footer
      %s20 = sadd.s32 1, %s16
    $region7: #{tpu_custom_call.1} parent=1 // loop_footer_branch
      %15 = sbr.rel target = $region3
    $region8: #{tpu_custom_call.1} parent=1 // loop_exit
      _
    %904 = vsyncpa [#allocation3], 1
    %s905 = scalar_lea.sflag [#allocation3], 1
    %906 = vsyncpa %s905, 1
    %907 = vsyncpa [#allocation6], 1
    %s908 = scalar_lea.sflag [#allocation6], 1
    %909 = vsyncpa %s908, 1
    %910 = vsyncpa [#allocation4], 1
    %s911 = scalar_lea.sflag [#allocation4], 1
    %912 = vsyncpa %s911, 1

</llo_original>
